<compile_context>
chip_gen: v5e
topology: v5e:2x2
jax: 0.10.0
libtpu: 0.0.40
codegen_flags: <defaults>
</compile_context>

<pallas_src>
import functools

import jax
import jax.numpy as jnp
from jax.experimental import pallas as pl
from jax.experimental.pallas import tpu as pltpu


def _round_up(x, m):
    return ((x + m - 1) // m) * m


def make_layout(state_dim, action_dim, hidden):
    """Row offsets of each fused, zero-padded parameter block inside the slab."""
    sp = _round_up(state_dim, 8)
    ap = _round_up(action_dim, 8)
    width = _round_up(2 * hidden, 128)         # fused hidden dim, lane-dense
    offs = {}
    r = 0
    offs["w1_s"] = r; r += sp                  # W1 rows for state features
    offs["w1_a"] = r; r += ap                  # W1 rows for action features
    offs["b1"] = r; r += 8
    offs["w2"] = r; r += width
    offs["b2"] = r; r += 8
    offs["w3"] = r; r += width
    offs["b3"] = r; r += 8
    offs["w4"] = r; r += width
    offs["b4"] = r; r += 8
    return dict(state_dim=state_dim, action_dim=action_dim, hidden=hidden,
                width=width, rows=r, offs=offs)


def pack_double_q_params(params1, params2, layout):
    """Pack both Q-nets into one zero-padded f32 slab (done once at init)."""
    S = layout["state_dim"]
    A = layout["action_dim"]
    H = layout["hidden"]
    W = layout["width"]
    offs = layout["offs"]
    w1a, b1a, w2a, b2a, w3a, b3a, w4a, b4a = params1
    w1b, b1b, w2b, b2b, w3b, b3b, w4b, b4b = params2

    slab = jnp.zeros((layout["rows"], W), jnp.float32)

    # layer 1: [W1a | W1b] along the output axis; rows split into state/action
    slab = slab.at[offs["w1_s"]:offs["w1_s"] + S, 0:H].set(w1a[:S])
    slab = slab.at[offs["w1_s"]:offs["w1_s"] + S, H:2 * H].set(w1b[:S])
    slab = slab.at[offs["w1_a"]:offs["w1_a"] + A, 0:H].set(w1a[S:])
    slab = slab.at[offs["w1_a"]:offs["w1_a"] + A, H:2 * H].set(w1b[S:])
    slab = slab.at[offs["b1"], 0:H].set(b1a)
    slab = slab.at[offs["b1"], H:2 * H].set(b1b)
    # layers 2/3: block-diagonal fused weights (no cross-net contamination)
    slab = slab.at[offs["w2"]:offs["w2"] + H, 0:H].set(w2a)
    slab = slab.at[offs["w2"] + H:offs["w2"] + 2 * H, H:2 * H].set(w2b)
    slab = slab.at[offs["b2"], 0:H].set(b2a)
    slab = slab.at[offs["b2"], H:2 * H].set(b2b)
    slab = slab.at[offs["w3"]:offs["w3"] + H, 0:H].set(w3a)
    slab = slab.at[offs["w3"] + H:offs["w3"] + 2 * H, H:2 * H].set(w3b)
    slab = slab.at[offs["b3"], 0:H].set(b3a)
    slab = slab.at[offs["b3"], H:2 * H].set(b3b)
    # layer 4: q1 goes to output column 0, q2 to column 1
    slab = slab.at[offs["w4"]:offs["w4"] + H, 0].set(w4a.reshape(-1))
    slab = slab.at[offs["w4"] + H:offs["w4"] + 2 * H, 1].set(w4b.reshape(-1))
    slab = slab.at[offs["b4"], 0:1].set(b4a)
    slab = slab.at[offs["b4"], 1:2].set(b4b)
    return slab


def double_q_kernel(state_ref, action_ref, p_ref, out_ref, *, offs):
    S = state_ref.shape[1]
    A = action_ref.shape[1]
    W = p_ref.shape[1]
    f32 = jnp.float32

    x_s = state_ref[...]
    x_a = action_ref[...]

    # layer 1 -- concat folded in: x @ W1 = state @ W1[:S] + action @ W1[S:]
    h = (jnp.dot(x_s, p_ref[offs["w1_s"]:offs["w1_s"] + S, :],
                 preferred_element_type=f32)
         + jnp.dot(x_a, p_ref[offs["w1_a"]:offs["w1_a"] + A, :],
                   preferred_element_type=f32)
         + p_ref[offs["b1"]:offs["b1"] + 1, :])
    h = jnp.maximum(h, 0.0)
    # layer 2 (block-diagonal fused)
    h = (jnp.dot(h, p_ref[offs["w2"]:offs["w2"] + W, :],
                 preferred_element_type=f32)
         + p_ref[offs["b2"]:offs["b2"] + 1, :])
    h = jnp.maximum(h, 0.0)
    # layer 3 (block-diagonal fused)
    h = (jnp.dot(h, p_ref[offs["w3"]:offs["w3"] + W, :],
                 preferred_element_type=f32)
         + p_ref[offs["b3"]:offs["b3"] + 1, :])
    h = jnp.maximum(h, 0.0)
    # layer 4: q1 in column 0, q2 in column 1, remaining lanes are zero pad
    out = (jnp.dot(h, p_ref[offs["w4"]:offs["w4"] + W, :],
                   preferred_element_type=f32)
           + p_ref[offs["b4"]:offs["b4"] + 1, :])
    out_ref[...] = out.astype(out_ref.dtype)


def double_q_forward(state, action, slab, layout, *, batch_tile=512):
    """DoubleQFunc.forward: returns (q1, q2), each of shape (batch, 1)."""
    B, S = state.shape
    A = action.shape[1]
    W = layout["width"]
    rows = layout["rows"]

    # one batch tile for small batches; tile (and pipeline) for large ones
    bt = batch_tile if (B > batch_tile and B % batch_tile == 0) else B
    grid = (B // bt,)

    kernel = functools.partial(double_q_kernel, offs=layout["offs"])
    out = pl.pallas_call(
        kernel,
        out_shape=jax.ShapeDtypeStruct((B, W), jnp.float32),
        grid=grid,
        in_specs=[
            pl.BlockSpec((bt, S), lambda i: (i, 0)),
            pl.BlockSpec((bt, A), lambda i: (i, 0)),
            pl.BlockSpec((rows, W), lambda i: (0, 0)),   # weights resident
        ],
        out_specs=pl.BlockSpec((bt, W), lambda i: (i, 0)),
        compiler_params=pltpu.CompilerParams(
            dimension_semantics=("parallel",)),
    )(state, action, slab)
    return out[:, 0:1], out[:, 1:2]


def init_mlp_params(key, input_dim, hidden_size, output_dim):
    """nn.Linear-style init; weights stored transposed: (in, out), biases (out,)."""
    dims = [(input_dim, hidden_size),
            (hidden_size, hidden_size),
            (hidden_size, hidden_size),
            (hidden_size, output_dim)]
    params = []
    for fan_in, fan_out in dims:
        key, kw, kb = jax.random.split(key, 3)
        bound = 1.0 / (fan_in ** 0.5)
        w = jax.random.uniform(kw, (fan_in, fan_out), jnp.float32, -bound, bound)
        b = jax.random.uniform(kb, (fan_out,), jnp.float32, -bound, bound)
        params.extend([w, b])
    return params, key


def reference_double_q(state, action, params1, params2):
    x = jnp.concatenate([state, action], axis=1)

    def mlp(x, p):
        w1, b1, w2, b2, w3, b3, w4, b4 = p
        h = jnp.maximum(x @ w1 + b1, 0.0)
        h = jnp.maximum(h @ w2 + b2, 0.0)
        h = jnp.maximum(h @ w3 + b3, 0.0)
        return h @ w4 + b4

    return mlp(x, params1), mlp(x, params2)


if __name__ == "__main__":
    # Small shapes consistent with DoubleQFunc(state_dim, action_dim, hidden_size)
    batch = 8
    state_dim = 16
    action_dim = 8
    hidden_size = 32   # module default is 256; small hidden for the self-test

    key = jax.random.PRNGKey(0)
    key, ks, ka = jax.random.split(key, 3)
    state = jax.random.normal(ks, (batch, state_dim), jnp.float32)
    action = jax.random.normal(ka, (batch, action_dim), jnp.float32)

    params1, key = init_mlp_params(key, state_dim + action_dim, hidden_size, 1)
    params2, key = init_mlp_params(key, state_dim + action_dim, hidden_size, 1)

    layout = make_layout(state_dim, action_dim, hidden_size)
    slab = jax.block_until_ready(pack_double_q_params(params1, params2, layout))

    q1, q2 = double_q_forward(state, action, slab, layout)
    q1 = jax.block_until_ready(q1)
    q2 = jax.block_until_ready(q2)

    # sanity check against pure-JAX reference
    r1, r2 = reference_double_q(state, action, params1, params2)
    assert q1.shape == (batch, 1) and q2.shape == (batch, 1)
    assert jnp.allclose(q1, r1, atol=1e-4, rtol=1e-4)
    assert jnp.allclose(q2, r2, atol=1e-4, rtol=1e-4)

    print("KERNEL_OK")
</pallas_src>

<mosaic_0001>
module attributes {stable_mosaic.version = 11 : i64} {
  func.func @double_q_kernel(%arg0: i32, %arg1: memref<8x16xf32, #tpu.memory_space<vmem>>, %arg2: memref<8x8xf32, #tpu.memory_space<vmem>>, %arg3: memref<440x128xf32, #tpu.memory_space<vmem>>, %arg4: memref<8x128xf32, #tpu.memory_space<vmem>>) attributes {dimension_semantics = [#tpu.dimension_semantics<parallel>], iteration_bounds = array<i64: 1>, scalar_prefetch = 0 : i64, scratch_operands = 0 : i64, tpu.core_type = #tpu.core_type<tc>, window_params = [{transform_indices = @transform_0, window_bounds = array<i64: 8, 16>}, {transform_indices = @transform_1, window_bounds = array<i64: 8, 8>}, {pipeline_mode = #tpu.pipeline_mode<synchronous>, transform_indices = @transform_2, window_bounds = array<i64: 440, 128>}, {transform_indices = @transform_3, window_bounds = array<i64: 8, 128>}]} {
    %c0 = arith.constant 0 : index
    %c0_0 = arith.constant 0 : index
    %0 = vector.load %arg1[%c0, %c0_0] : memref<8x16xf32, #tpu.memory_space<vmem>>, vector<8x16xf32>
    %c0_1 = arith.constant 0 : index
    %c0_2 = arith.constant 0 : index
    %1 = vector.load %arg2[%c0_1, %c0_2] : memref<8x8xf32, #tpu.memory_space<vmem>>, vector<8x8xf32>
    %c0_3 = arith.constant 0 : index
    %c0_4 = arith.constant 0 : index
    %2 = vector.load %arg3[%c0_3, %c0_4] : memref<440x128xf32, #tpu.memory_space<vmem>>, vector<16x128xf32>
    %cst = arith.constant dense<0.000000e+00> : vector<8x128xf32>
    %3 = tpu.matmul %0, %2, %cst {dimension_numbers = #tpu.dot_dimension_numbers<[1], [0], [0], [1], [0, 0, 1, 1], [], []>} : vector<8x16xf32>, vector<16x128xf32>, vector<8x128xf32> -> vector<8x128xf32>
    %c16 = arith.constant 16 : index
    %c0_5 = arith.constant 0 : index
    %4 = vector.load %arg3[%c16, %c0_5] : memref<440x128xf32, #tpu.memory_space<vmem>>, vector<8x128xf32>
    %cst_6 = arith.constant dense<0.000000e+00> : vector<8x128xf32>
    %5 = tpu.matmul %1, %4, %cst_6 {dimension_numbers = #tpu.dot_dimension_numbers<[1], [0], [0], [1], [0, 0, 1, 1], [], []>} : vector<8x8xf32>, vector<8x128xf32>, vector<8x128xf32> -> vector<8x128xf32>
    %6 = arith.addf %3, %5 : vector<8x128xf32>
    %c24 = arith.constant 24 : index
    %c0_7 = arith.constant 0 : index
    %7 = vector.load %arg3[%c24, %c0_7] : memref<440x128xf32, #tpu.memory_space<vmem>>, vector<1x128xf32>
    %8 = vector.broadcast %7 : vector<1x128xf32> to vector<8x128xf32>
    %9 = arith.addf %6, %8 : vector<8x128xf32>
    %cst_8 = arith.constant 0.000000e+00 : f32
    %10 = vector.broadcast %cst_8 : f32 to vector<8x128xf32>
    %11 = arith.maximumf %9, %10 : vector<8x128xf32>
    %c32 = arith.constant 32 : index
    %c0_9 = arith.constant 0 : index
    %12 = vector.load %arg3[%c32, %c0_9] : memref<440x128xf32, #tpu.memory_space<vmem>>, vector<128x128xf32>
    %cst_10 = arith.constant dense<0.000000e+00> : vector<8x128xf32>
    %13 = tpu.matmul %11, %12, %cst_10 {dimension_numbers = #tpu.dot_dimension_numbers<[1], [0], [0], [1], [0, 0, 1, 1], [], []>} : vector<8x128xf32>, vector<128x128xf32>, vector<8x128xf32> -> vector<8x128xf32>
    %c160 = arith.constant 160 : index
    %c0_11 = arith.constant 0 : index
    %14 = vector.load %arg3[%c160, %c0_11] : memref<440x128xf32, #tpu.memory_space<vmem>>, vector<1x128xf32>
    %15 = vector.broadcast %14 : vector<1x128xf32> to vector<8x128xf32>
    %16 = arith.addf %13, %15 : vector<8x128xf32>
    %cst_12 = arith.constant 0.000000e+00 : f32
    %17 = vector.broadcast %cst_12 : f32 to vector<8x128xf32>
    %18 = arith.maximumf %16, %17 : vector<8x128xf32>
    %c168 = arith.constant 168 : index
    %c0_13 = arith.constant 0 : index
    %19 = vector.load %arg3[%c168, %c0_13] : memref<440x128xf32, #tpu.memory_space<vmem>>, vector<128x128xf32>
    %cst_14 = arith.constant dense<0.000000e+00> : vector<8x128xf32>
    %20 = tpu.matmul %18, %19, %cst_14 {dimension_numbers = #tpu.dot_dimension_numbers<[1], [0], [0], [1], [0, 0, 1, 1], [], []>} : vector<8x128xf32>, vector<128x128xf32>, vector<8x128xf32> -> vector<8x128xf32>
    %c296 = arith.constant 296 : index
    %c0_15 = arith.constant 0 : index
    %21 = vector.load %arg3[%c296, %c0_15] : memref<440x128xf32, #tpu.memory_space<vmem>>, vector<1x128xf32>
    %22 = vector.broadcast %21 : vector<1x128xf32> to vector<8x128xf32>
    %23 = arith.addf %20, %22 : vector<8x128xf32>
    %cst_16 = arith.constant 0.000000e+00 : f32
    %24 = vector.broadcast %cst_16 : f32 to vector<8x128xf32>
    %25 = arith.maximumf %23, %24 : vector<8x128xf32>
    %c304 = arith.constant 304 : index
    %c0_17 = arith.constant 0 : index
    %26 = vector.load %arg3[%c304, %c0_17] : memref<440x128xf32, #tpu.memory_space<vmem>>, vector<128x128xf32>
    %cst_18 = arith.constant dense<0.000000e+00> : vector<8x128xf32>
    %27 = tpu.matmul %25, %26, %cst_18 {dimension_numbers = #tpu.dot_dimension_numbers<[1], [0], [0], [1], [0, 0, 1, 1], [], []>} : vector<8x128xf32>, vector<128x128xf32>, vector<8x128xf32> -> vector<8x128xf32>
    %c432 = arith.constant 432 : index
    %c0_19 = arith.constant 0 : index
    %28 = vector.load %arg3[%c432, %c0_19] : memref<440x128xf32, #tpu.memory_space<vmem>>, vector<1x128xf32>
    %29 = vector.broadcast %28 : vector<1x128xf32> to vector<8x128xf32>
    %30 = arith.addf %27, %29 : vector<8x128xf32>
    %c0_20 = arith.constant 0 : index
    %c0_21 = arith.constant 0 : index
    %31 = vector.load %arg4[%c0_20, %c0_21] : memref<8x128xf32, #tpu.memory_space<vmem>>, vector<8x128xf32>
    tpu.vector_store %arg4[%c0_20, %c0_21], %30 {strides = array<i32>} : memref<8x128xf32, #tpu.memory_space<vmem>>, vector<8x128xf32>,
    return
  }
  func.func @transform_0(%arg0: i32) -> (i32, i32) {
    %c0_i32 = arith.constant 0 : i32
    %c0_i32_0 = arith.constant 0 : i32
    return %arg0, %c0_i32 : i32, i32
  }
  func.func @transform_1(%arg0: i32) -> (i32, i32) {
    %c0_i32 = arith.constant 0 : i32
    %c0_i32_0 = arith.constant 0 : i32
    return %arg0, %c0_i32 : i32, i32
  }
  func.func @transform_2(%arg0: i32) -> (i32, i32) {
    %c0_i32 = arith.constant 0 : i32
    %c0_i32_0 = arith.constant 0 : i32
    %c0_i32_1 = arith.constant 0 : i32
    return %c0_i32, %c0_i32_0 : i32, i32
  }
  func.func @transform_3(%arg0: i32) -> (i32, i32) {
    %c0_i32 = arith.constant 0 : i32
    %c0_i32_0 = arith.constant 0 : i32
    return %arg0, %c0_i32 : i32, i32
  }
}

</mosaic_0001>

<llo_original>
// kernel: tpu_custom_call.1
$region0: #{tpu_custom_call.1}
  #allocation0 [shape = 'u32[]', space=smem, size = 0x4, offset = 0x4, fixed_abs, tag = 'smem constant byte address 0x4 - core index']
  #allocation1 [shape = 'u32[72,128]{1,0:T(1,128)}', space=vmem, size = 0x9000, scoped, tag = 'internal scratch']
  %s0 = inlined_call_operand.hbm [shape: f32[8,16], index: 0, kind: input, shape index: {}]
  %s1 = inlined_call_operand.hbm [shape: f32[8,8], index: 1, kind: input, shape index: {}]
  %s2 = inlined_call_operand.hbm [shape: f32[440,128], index: 2, kind: input, shape index: {}]
  %s3 = inlined_call_operand.hbm [shape: f32[8,128], index: 3, kind: output, shape index: {}]
  %s4 = sld [smem:[#allocation0]]
  $region34: #{tpu_custom_call.1} parent=0
    _
  %s6 = ssub.s32 1, %s4
  %s7 = scalar_select 0, %s6, %s4
  $region1: #{tpu_custom_call.1} parent=0
    #allocation2 [shape = 'u8[4096]{0}', space=vmem, size = 0x1000, scoped, tag = 'input window, operand 0, single buffered']
    #allocation3 [shape = 's32[1]{0}', space=sflag, size = 0x4, scoped, tag = 'scoped memory for tpu_custom_call.1']
    #allocation4 [shape = 's32[1]{0}', space=sflag, size = 0x4, scoped, tag = 'scoped memory for tpu_custom_call.1']
    #allocation5 [shape = 'u8[4096]{0}', space=vmem, size = 0x1000, scoped, tag = 'input window, operand 1, single buffered']
    #allocation6 [shape = 's32[1]{0}', space=sflag, size = 0x4, scoped, tag = 'scoped memory for tpu_custom_call.1']
    #allocation7 [shape = 'u8[225280]{0}', space=vmem, size = 0x37000, scoped, tag = 'input window, operand 2, single buffered']
    #allocation8 [shape = 'u8[4096]{0}', space=vmem, size = 0x1000, scoped, tag = 'output window, operand 0, single buffered']
    %8 = vsyncpa [#allocation3], 0
    %9 = vsyncpa [#allocation6], 0
    %10 = vsyncpa [#allocation4], 0
    // Predicated region
    $region2: #{tpu_custom_call.1} parent=1 // pred_check
      _
    $region3: #{tpu_custom_call.1} parent=1 // pred_check_branch
      %12 = sbr.rel (0) target = $region5
    $region4: #{tpu_custom_call.1} parent=1 // pred_region
      %14 = vsyncadd [#allocation3], 0
      %s16 = sshll.u32 %s0, 4
      %s17 = int_to_ptr.hbm [resolvable:$true] %s16
      %s18 = sshll.u32 [#allocation2], 4
      %s19 = int_to_ptr.vmem [resolvable:$true] %s18
      %21 = dma.hbm_to_vmem [thread:$0]  %s17, 128, %s19, [#allocation3]
    $region5: #{tpu_custom_call.1} parent=1 // pred_fallthru
      _
    // Predicated region
    $region6: #{tpu_custom_call.1} parent=1 // pred_check
      _
    $region7: #{tpu_custom_call.1} parent=1 // pred_check_branch
      %23 = sbr.rel (0) target = $region9
    $region8: #{tpu_custom_call.1} parent=1 // pred_region
      %25 = vsyncadd [#allocation6], 0
      %s27 = sshll.u32 %s1, 4
      %s28 = int_to_ptr.hbm [resolvable:$true] %s27
      %s29 = sshll.u32 [#allocation5], 4
      %s30 = int_to_ptr.vmem [resolvable:$true] %s29
      %32 = dma.hbm_to_vmem [thread:$0]  %s28, 128, %s30, [#allocation6]
    $region9: #{tpu_custom_call.1} parent=1 // pred_fallthru
      _
    // Predicated region
    $region10: #{tpu_custom_call.1} parent=1 // pred_check
      _
    $region11: #{tpu_custom_call.1} parent=1 // pred_check_branch
      %34 = sbr.rel (0) target = $region13
    $region12: #{tpu_custom_call.1} parent=1 // pred_region
      %36 = vsyncadd [#allocation6], 0
      %s37 = sshll.u32 %s2, 4
      %s38 = int_to_ptr.hbm [resolvable:$true] %s37
      %s39 = sshll.u32 [#allocation7], 4
      %s40 = int_to_ptr.vmem [resolvable:$true] %s39
      %45 = dma.hbm_to_vmem [thread:$0]  %s38, 7040, %s40, [#allocation6], 128, 128, 8
    $region13: #{tpu_custom_call.1} parent=1 // pred_fallthru
      _
    // Predicated region
    $region14: #{tpu_custom_call.1} parent=1 // pred_check
      _
    $region15: #{tpu_custom_call.1} parent=1 // pred_check_branch
      %47 = sbr.rel (0) target = $region17
    $region16: #{tpu_custom_call.1} parent=1 // pred_region
      %49 = dma.done [#allocation3], 128
    $region17: #{tpu_custom_call.1} parent=1 // pred_fallthru
      _
    // Predicated region
    $region18: #{tpu_custom_call.1} parent=1 // pred_check
      _
    $region19: #{tpu_custom_call.1} parent=1 // pred_check_branch
      %51 = sbr.rel (0) target = $region21
    $region20: #{tpu_custom_call.1} parent=1 // pred_region
      %53 = dma.done [#allocation6], 128
    $region21: #{tpu_custom_call.1} parent=1 // pred_fallthru
      _
    // Predicated region
    $region22: #{tpu_custom_call.1} parent=1 // pred_check
      _
    $region23: #{tpu_custom_call.1} parent=1 // pred_check_branch
      %55 = sbr.rel (0) target = $region25
    $region24: #{tpu_custom_call.1} parent=1 // pred_region
      %57 = dma.done [#allocation6], 7040
    $region25: #{tpu_custom_call.1} parent=1 // pred_fallthru
      _
    %v58 = vld [vmem:[#allocation2] sm:$0xff]
    %v59 = vld [vmem:[#allocation5] sm:$0xff]
    %v60 = vld [vmem:[#allocation7] sm:$0xff]
    %v61 = vld [vmem:[#allocation7 + $0x8] sm:$0xff]
    %v62 = vld [vmem:[#allocation7 + $0x10] sm:$0xff]
    %vm63 = vcmask 64512
    %v65 = vsel %vm63, %v59, 0
    %67 = vmatpush.msra.mxu0 0.0
    %68 = vmatpush.msra.mxu0 0.0
    %69 = vmatpush.msra.mxu0 0.0
    %70 = vmatpush.msra.mxu0 0.0
    %71 = vmatpush.msra.mxu0 0.0
    %72 = vmatpush.msra.mxu0 0.0
    %73 = vmatpush.msra.mxu0 0.0
    %74 = vmatpush.msra.mxu0 0.0
    %75 = vmatpush.msra.mxu0 0.0
    %76 = vmatpush.msra.mxu0 0.0
    %77 = vmatpush.msra.mxu0 0.0
    %78 = vmatpush.msra.mxu0 0.0
    %79 = vmatpush.msra.mxu0 0.0
    %80 = vmatpush.msra.mxu0 0.0
    %81 = vmatpush.msra.mxu0 0.0
    %82 = vmatpush.msra.mxu0 %v62
    %83 = vmatmul.f32.gmra.mxu0 %v65
    %v84 = vpop.f32.mrf.mxu0
    %v85 = vadd.f32 0.0, %v84
    %86 = vdwg.mxu0
    %vm87 = vcmask 130048
    %v89 = vsel %vm87, %v58, 0
    %91 = vmatpush.msra.mxu0 0.0
    %92 = vmatpush.msra.mxu0 0.0
    %93 = vmatpush.msra.mxu0 0.0
    %94 = vmatpush.msra.mxu0 0.0
    %95 = vmatpush.msra.mxu0 0.0
    %96 = vmatpush.msra.mxu0 0.0
    %97 = vmatpush.msra.mxu0 0.0
    %98 = vmatpush.msra.mxu0 0.0
    %99 = vmatpush.msra.mxu0 0.0
    %100 = vmatpush.msra.mxu0 0.0
    %101 = vmatpush.msra.mxu0 0.0
    %102 = vmatpush.msra.mxu0 0.0
    %103 = vmatpush.msra.mxu0 0.0
    %104 = vmatpush.msra.mxu0 0.0
    %105 = vmatpush.msra.mxu0 %v61
    %106 = vmatpush.msra.mxu0 %v60
    %107 = vmatmul.f32.gmra.mxu0 %v89
    %v108 = vpop.f32.mrf.mxu0
    %v109 = vadd.f32 %v85, %v108
    %110 = vdwg.mxu0
    %v111 = vld [vmem:[#allocation7 + $0x18] sm:$0x1]
    %v112 = vperm.slane %v111, 0
    %v113 = vadd.f32 %v109, %v112
    %v114 = vmax.f32 %v113, 0.0
    %v115 = vld [vmem:[#allocation7 + $0x20] sm:$0xff]
    %v116 = vld [vmem:[#allocation7 + $0x28] sm:$0xff]
    %v117 = vld [vmem:[#allocation7 + $0x30] sm:$0xff]
    %v118 = vld [vmem:[#allocation7 + $0x38] sm:$0xff]
    %v119 = vld [vmem:[#allocation7 + $0x40] sm:$0xff]
    %v120 = vld [vmem:[#allocation7 + $0x48] sm:$0xff]
    %v121 = vld [vmem:[#allocation7 + $0x50] sm:$0xff]
    %v122 = vld [vmem:[#allocation7 + $0x58] sm:$0xff]
    %v123 = vld [vmem:[#allocation7 + $0x60] sm:$0xff]
    %v124 = vld [vmem:[#allocation7 + $0x68] sm:$0xff]
    %v125 = vld [vmem:[#allocation7 + $0x70] sm:$0xff]
    %v126 = vld [vmem:[#allocation7 + $0x78] sm:$0xff]
    %v127 = vld [vmem:[#allocation7 + $0x80] sm:$0xff]
    %v128 = vld [vmem:[#allocation7 + $0x88] sm:$0xff]
    %v129 = vld [vmem:[#allocation7 + $0x90] sm:$0xff]
    %v130 = vld [vmem:[#allocation7 + $0x98] sm:$0xff]
    %v131 = vld [vmem:[#allocation7 + $0xa0] sm:$0x1]
    %v132 = vperm.slane %v131, 0
    %133 = vmatpush.msra.mxu0 %v130
    %134 = vmatpush.msra.mxu0 %v129
    %135 = vmatpush.msra.mxu0 %v128
    %136 = vmatpush.msra.mxu0 %v127
    %137 = vmatpush.msra.mxu0 %v126
    %138 = vmatpush.msra.mxu0 %v125
    %139 = vmatpush.msra.mxu0 %v124
    %140 = vmatpush.msra.mxu0 %v123
    %141 = vmatpush.msra.mxu0 %v122
    %142 = vmatpush.msra.mxu0 %v121
    %143 = vmatpush.msra.mxu0 %v120
    %144 = vmatpush.msra.mxu0 %v119
    %145 = vmatpush.msra.mxu0 %v118
    %146 = vmatpush.msra.mxu0 %v117
    %147 = vmatpush.msra.mxu0 %v116
    %148 = vmatpush.msra.mxu0 %v115
    %149 = vmatmul.f32.gmra.mxu0 %v114
    %v150 = vpop.f32.mrf.mxu0
    %v151 = vadd.f32 %v132, %v150
    %152 = vdwg.mxu0
    %v153 = vmax.f32 %v151, 0.0
    %v154 = vld [vmem:[#allocation7 + $0xa8] sm:$0xff]
    %v155 = vld [vmem:[#allocation7 + $0xb0] sm:$0xff]
    %v156 = vld [vmem:[#allocation7 + $0xb8] sm:$0xff]
    %v157 = vld [vmem:[#allocation7 + $0xc0] sm:$0xff]
    %v158 = vld [vmem:[#allocation7 + $0xc8] sm:$0xff]
    %v159 = vld [vmem:[#allocation7 + $0xd0] sm:$0xff]
    %v160 = vld [vmem:[#allocation7 + $0xd8] sm:$0xff]
    %v161 = vld [vmem:[#allocation7 + $0xe0] sm:$0xff]
    %v162 = vld [vmem:[#allocation7 + $0xe8] sm:$0xff]
    %v163 = vld [vmem:[#allocation7 + $0xf0] sm:$0xff]
    %v164 = vld [vmem:[#allocation7 + $0xf8] sm:$0xff]
    %v165 = vld [vmem:[#allocation7 + $0x100] sm:$0xff]
    %v166 = vld [vmem:[#allocation7 + $0x108] sm:$0xff]
    %v167 = vld [vmem:[#allocation7 + $0x110] sm:$0xff]
    %v168 = vld [vmem:[#allocation7 + $0x118] sm:$0xff]
    %v169 = vld [vmem:[#allocation7 + $0x120] sm:$0xff]
    %v170 = vld [vmem:[#allocation7 + $0x128] sm:$0x1]
    %v171 = vperm.slane %v170, 0
    %172 = vmatpush.msra.mxu0 %v169
    %173 = vmatpush.msra.mxu0 %v168
    %174 = vmatpush.msra.mxu0 %v167
    %175 = vmatpush.msra.mxu0 %v166
    %176 = vmatpush.msra.mxu0 %v165
    %177 = vmatpush.msra.mxu0 %v164
    %178 = vmatpush.msra.mxu0 %v163
    %179 = vmatpush.msra.mxu0 %v162
    %180 = vmatpush.msra.mxu0 %v161
    %181 = vmatpush.msra.mxu0 %v160
    %182 = vmatpush.msra.mxu0 %v159
    %183 = vmatpush.msra.mxu0 %v158
    %184 = vmatpush.msra.mxu0 %v157
    %185 = vmatpush.msra.mxu0 %v156
    %186 = vmatpush.msra.mxu0 %v155
    %187 = vmatpush.msra.mxu0 %v154
    %188 = vmatmul.f32.gmra.mxu0 %v153
    %v189 = vpop.f32.mrf.mxu0
    %v190 = vadd.f32 %v171, %v189
    %191 = vdwg.mxu0
    %v192 = vmax.f32 %v190, 0.0
    %v193 = vld [vmem:[#allocation7 + $0x130] sm:$0xff]
    %v194 = vld [vmem:[#allocation7 + $0x138] sm:$0xff]
    %v195 = vld [vmem:[#allocation7 + $0x140] sm:$0xff]
    %v196 = vld [vmem:[#allocation7 + $0x148] sm:$0xff]
    %v197 = vld [vmem:[#allocation7 + $0x150] sm:$0xff]
    %v198 = vld [vmem:[#allocation7 + $0x158] sm:$0xff]
    %v199 = vld [vmem:[#allocation7 + $0x160] sm:$0xff]
    %v200 = vld [vmem:[#allocation7 + $0x168] sm:$0xff]
    %v201 = vld [vmem:[#allocation7 + $0x170] sm:$0xff]
    %v202 = vld [vmem:[#allocation7 + $0x178] sm:$0xff]
    %v203 = vld [vmem:[#allocation7 + $0x180] sm:$0xff]
    %v204 = vld [vmem:[#allocation7 + $0x188] sm:$0xff]
    %v205 = vld [vmem:[#allocation7 + $0x190] sm:$0xff]
    %v206 = vld [vmem:[#allocation7 + $0x198] sm:$0xff]
    %v207 = vld [vmem:[#allocation7 + $0x1a0] sm:$0xff]
    %v208 = vld [vmem:[#allocation7 + $0x1a8] sm:$0xff]
    %v209 = vld [vmem:[#allocation7 + $0x1b0] sm:$0x1]
    %v210 = vperm.slane %v209, 0
    %211 = vmatpush.msra.mxu0 %v208
    %212 = vmatpush.msra.mxu0 %v207
    %213 = vmatpush.msra.mxu0 %v206
    %214 = vmatpush.msra.mxu0 %v205
    %215 = vmatpush.msra.mxu0 %v204
    %216 = vmatpush.msra.mxu0 %v203
    %217 = vmatpush.msra.mxu0 %v202
    %218 = vmatpush.msra.mxu0 %v201
    %219 = vmatpush.msra.mxu0 %v200
    %220 = vmatpush.msra.mxu0 %v199
    %221 = vmatpush.msra.mxu0 %v198
    %222 = vmatpush.msra.mxu0 %v197
    %223 = vmatpush.msra.mxu0 %v196
    %224 = vmatpush.msra.mxu0 %v195
    %225 = vmatpush.msra.mxu0 %v194
    %226 = vmatpush.msra.mxu0 %v193
    %227 = vmatmul.f32.gmra.mxu0 %v192
    %v228 = vpop.f32.mrf.mxu0
    %v229 = vadd.f32 %v210, %v228
    %230 = vdwg.mxu0
    %231 = vst [vmem:[#allocation8] sm:$0xff] %v229
    // Predicated region
    $region26: #{tpu_custom_call.1} parent=1 // pred_check
      _
    $region27: #{tpu_custom_call.1} parent=1 // pred_check_branch
      %233 = sbr.rel (0) target = $region29
    $region28: #{tpu_custom_call.1} parent=1 // pred_region
      %235 = vsyncadd [#allocation4], 0
      %s237 = sshll.u32 [#allocation8], 4
      %s238 = int_to_ptr.vmem [resolvable:$true] %s237
      %s239 = sshll.u32 %s3, 4
      %s240 = int_to_ptr.hbm [resolvable:$true] %s239
      %242 = dma.vmem_to_hbm [thread:$0]  %s238, 128, %s240, [#allocation4]
    $region29: #{tpu_custom_call.1} parent=1 // pred_fallthru
      _
    // Predicated region
    $region30: #{tpu_custom_call.1} parent=1 // pred_check
      _
    $region31: #{tpu_custom_call.1} parent=1 // pred_check_branch
      %244 = sbr.rel (0) target = $region33
    $region32: #{tpu_custom_call.1} parent=1 // pred_region
      %246 = dma.done [#allocation4], 128
    $region33: #{tpu_custom_call.1} parent=1 // pred_fallthru
      _
    %247 = vsyncpa [#allocation3], 1
    %248 = vsyncpa [#allocation6], 1
    %249 = vsyncpa [#allocation4], 1

</llo_original>
